<compile_context>
chip_gen: v7x
topology: tpu7x:2x2x1
jax: 0.10.0
libtpu: 0.0.40
codegen_flags: <defaults>
</compile_context>

<pallas_src>
import functools

import jax
import jax.numpy as jnp
from jax.experimental import pallas as pl
from jax.experimental.pallas import tpu as pltpu

# ---- model hyperparameters (opt) -------------------------------------------
B = 2              # batch
S = 16             # sequence length
D = 32             # word_dim (e.g. elmo_dim)
NUM_FILTERS = 8    # opt.num_filters
KS = (2, 3, 4)     # opt.k
NUM_LABELS = 4     # opt.num_labels

KMAX = max(KS)
KD = KMAX * D                                # im2col depth = 128 (lane-dense)
NUM_COLS = NUM_FILTERS * len(KS)             # 24 real pooled conv features
N_PAD = 128                                  # lane-dense feature / logit width
TILE_B = 16                                  # sequences per grid step (M = 256)


def textcnn_kernel(xw_ref, wp_ref, wl_ref, b_ref, mask_ref, out_ref):
    """Fused conv(all k)+mask+max-over-time+bias+ReLU+linear on one tile."""
    tb = xw_ref.shape[0]

    # lane-dense bf16 im2col windows were built in the wrapper: (tb, S, 128)
    lhs = xw_ref[...].reshape(tb * S, KD)                       # bf16 (tb*S, 128)

    # one fused MXU matmul for all 2/3/4-wide convs: K=128, N=128 (24 real)
    conv = jnp.dot(lhs, wp_ref[...], preferred_element_type=jnp.float32)
    conv = conv.reshape(tb, S, N_PAD)                           # (tb, S, 128) f32

    # additive 0/-inf validity mask (precomputed), then max over time
    pooled = jnp.max(conv + mask_ref[...][None], axis=1)        # (tb, 128)

    # bias + ReLU commuted past the pool; dropout = eval-mode identity
    feats = jnp.maximum(pooled + b_ref[0:1, :], 0.0)            # (tb, 128)

    # final linear inside the padded 128-lane slab -> lane-dense store
    out = jnp.dot(feats, wl_ref[...], preferred_element_type=jnp.float32)
    out_ref[...] = (out + b_ref[1:2, :]).astype(out_ref.dtype)  # (tb, 128)


def pack_params(params):
    """Init-time (one-off) weight packing:
      wp    (KD=128, 128) bf16 : per-k conv weights zero-padded in depth,
                                 concatenated along filters, zero pad columns.
      wl    (128, 128)   f32  : linear weight in [:24, :4], zeros elsewhere.
      b_all (2, 128)     f32  : row 0 conv biases, row 1 linear bias.
      mask  (S, 128)     f32  : 0 where window start t is valid for that
                                column's kernel size, -inf otherwise.
    Zero pad columns are numerically inert end-to-end (0 conv -> ReLU 0 ->
    zero wl rows -> 0 contribution)."""
    wp = jnp.zeros((KD, N_PAD), jnp.float32)
    b_all = jnp.zeros((2, N_PAD), jnp.float32)
    mask = jnp.zeros((S, N_PAD), jnp.float32)
    t = jnp.arange(S)[:, None]
    for g, k in enumerate(KS):
        w, b = params[2 * g], params[2 * g + 1]                 # (k, D, F), (1, F)
        lo, hi = g * NUM_FILTERS, (g + 1) * NUM_FILTERS
        wp = wp.at[: k * D, lo:hi].set(w.reshape(k * D, NUM_FILTERS))
        b_all = b_all.at[0, lo:hi].set(b[0])
        col_mask = jnp.where(t > S - k, -jnp.inf, 0.0)          # valid t: 0..S-k
        mask = mask.at[:, lo:hi].set(jnp.broadcast_to(col_mask, (S, NUM_FILTERS)))
    wl, bl = params[-2], params[-1]                             # (24, L), (1, L)
    wl_pad = jnp.zeros((N_PAD, N_PAD), jnp.float32).at[:NUM_COLS, :NUM_LABELS].set(wl)
    b_all = b_all.at[1, :NUM_LABELS].set(bl[0])
    return wp.astype(jnp.bfloat16), wl_pad, b_all, mask


@jax.jit
def textcnn_forward(x, wp, wl, b_all, mask):
    """x: (batch, S, D) f32 word embeddings (stand-in for get_elmo output)."""
    bsz = x.shape[0]
    b_pad = ((bsz + TILE_B - 1) // TILE_B) * TILE_B

    # bf16 embeddings; pad batch to a tile multiple and time by KMAX-1 zeros,
    # then build the lane-dense im2col window tensor (b_pad, S, KMAX*D=128).
    xb = jnp.pad(x.astype(jnp.bfloat16),
                 ((0, b_pad - bsz), (0, KMAX - 1), (0, 0)))
    win = jnp.concatenate([xb[:, j:j + S, :] for j in range(KMAX)], axis=-1)

    out = pl.pallas_call(
        textcnn_kernel,
        out_shape=jax.ShapeDtypeStruct((b_pad, N_PAD), jnp.float32),
        grid_spec=pltpu.PrefetchScalarGridSpec(
            num_scalar_prefetch=0,
            grid=(b_pad // TILE_B,),
            in_specs=[
                pl.BlockSpec((TILE_B, S, KD), lambda i: (i, 0, 0)),
                pl.BlockSpec((KD, N_PAD), lambda i: (0, 0)),
                pl.BlockSpec((N_PAD, N_PAD), lambda i: (0, 0)),
                pl.BlockSpec((2, N_PAD), lambda i: (0, 0)),
                pl.BlockSpec((S, N_PAD), lambda i: (0, 0)),
            ],
            out_specs=pl.BlockSpec((TILE_B, N_PAD), lambda i: (i, 0)),
        ),
        compiler_params=pltpu.CompilerParams(
            dimension_semantics=("parallel",)),   # batch tiles shard across TCs
    )(win, wp, wl, b_all, mask)
    return out[:bsz, :NUM_LABELS]


def init_params(key):
    """Deterministic init matching the torch shapes (xavier-style scales)."""
    params = []
    for k in KS:
        key, k1 = jax.random.split(key)
        fan_in, fan_out = k * D, NUM_FILTERS * k * D
        std = (2.0 / (fan_in + fan_out)) ** 0.5                 # xavier_normal_
        w = std * jax.random.normal(k1, (k, D, NUM_FILTERS), jnp.float32)
        b = jnp.zeros((1, NUM_FILTERS), jnp.float32)            # constant_(bias, 0.0)
        params += [w, b]
    key, k2 = jax.random.split(key)
    fin, fout = NUM_COLS, NUM_LABELS
    lim = (6.0 / (fin + fout)) ** 0.5                           # xavier_uniform_
    wl = jax.random.uniform(k2, (fin, fout), jnp.float32, -lim, lim)
    bl = jnp.zeros((1, NUM_LABELS), jnp.float32)
    return params + [wl, bl]


def reference(x, params):
    """Plain-JAX reference mirroring the PyTorch forward (on the same
    bf16-rounded embeddings / conv weights the kernel consumes)."""
    hi = jax.lax.Precision.HIGHEST
    xr = x.astype(jnp.bfloat16).astype(jnp.float32)
    pooled = []
    for g, k in enumerate(KS):
        w = params[2 * g].astype(jnp.bfloat16).astype(jnp.float32)
        b = params[2 * g + 1]
        T = S - k + 1
        acc = jnp.zeros((x.shape[0], T, NUM_FILTERS), jnp.float32)
        for j in range(k):
            acc = acc + jnp.einsum('btd,df->btf', xr[:, j:j + T, :], w[j], precision=hi)
        conv = jax.nn.relu(acc + b[None, :, :])
        pooled.append(jnp.max(conv, axis=1))
    feats = jnp.concatenate(pooled, axis=-1)
    return jnp.dot(feats, params[-2], precision=hi) + params[-1]


if __name__ == "__main__":
    key = jax.random.PRNGKey(0)
    key, kx = jax.random.split(key)
    # word embeddings standing in for get_elmo(...) output
    x = jax.random.normal(kx, (B, S, D), jnp.float32)
    params = init_params(key)

    # one-off, init-time weight packing (outside the per-call forward)
    wp, wl, b_all, mask = pack_params(params)

    out = jax.block_until_ready(textcnn_forward(x, wp, wl, b_all, mask))
    ref = jax.block_until_ready(reference(x, params))

    assert out.shape == (B, NUM_LABELS)
    # bf16 activation/weight feed -> compare at bf16-level tolerance.
    assert jnp.allclose(out, ref, atol=1e-2, rtol=1e-2), (out, ref)

    # TODO(synk): ELMo/GloVe embedding lookup (external pretrained models) and
    # dropout RNG are handled outside the kernel (embeddings are inputs;
    # dropout = eval mode identity).
    print("KERNEL_OK")
</pallas_src>

<mosaic_0001>
module attributes {stable_mosaic.version = 11 : i64} {
  func.func @textcnn_kernel(%arg0: i32, %arg1: memref<16x16x128xbf16, #tpu.memory_space<vmem>>, %arg2: memref<128x128xbf16, #tpu.memory_space<vmem>>, %arg3: memref<128x128xf32, #tpu.memory_space<vmem>>, %arg4: memref<2x128xf32, #tpu.memory_space<vmem>>, %arg5: memref<16x128xf32, #tpu.memory_space<vmem>>, %arg6: memref<16x128xf32, #tpu.memory_space<vmem>>) attributes {dimension_semantics = [#tpu.dimension_semantics<parallel>], iteration_bounds = array<i64: 1>, scalar_prefetch = 0 : i64, scratch_operands = 0 : i64, tpu.core_type = #tpu.core_type<tc>, window_params = [{transform_indices = @transform_0, window_bounds = array<i64: 16, 16, 128>}, {pipeline_mode = #tpu.pipeline_mode<synchronous>, transform_indices = @transform_1, window_bounds = array<i64: 128, 128>}, {pipeline_mode = #tpu.pipeline_mode<synchronous>, transform_indices = @transform_2, window_bounds = array<i64: 128, 128>}, {pipeline_mode = #tpu.pipeline_mode<synchronous>, transform_indices = @transform_3, window_bounds = array<i64: 2, 128>}, {pipeline_mode = #tpu.pipeline_mode<synchronous>, transform_indices = @transform_4, window_bounds = array<i64: 16, 128>}, {transform_indices = @transform_5, window_bounds = array<i64: 16, 128>}]} {
    %c0 = arith.constant 0 : index
    %c0_0 = arith.constant 0 : index
    %c0_1 = arith.constant 0 : index
    %0 = vector.load %arg1[%c0, %c0_0, %c0_1] : memref<16x16x128xbf16, #tpu.memory_space<vmem>>, vector<16x16x128xbf16>
    %1 = vector.shape_cast %0 : vector<16x16x128xbf16> to vector<256x128xbf16>
    %c0_2 = arith.constant 0 : index
    %c0_3 = arith.constant 0 : index
    %2 = vector.load %arg2[%c0_2, %c0_3] : memref<128x128xbf16, #tpu.memory_space<vmem>>, vector<128x128xbf16>
    %cst = arith.constant dense<0.000000e+00> : vector<256x128xf32>
    %3 = tpu.matmul %1, %2, %cst {dimension_numbers = #tpu.dot_dimension_numbers<[1], [0], [0], [1], [0, 0, 1, 1], [], []>} : vector<256x128xbf16>, vector<128x128xbf16>, vector<256x128xf32> -> vector<256x128xf32>
    %4 = vector.shape_cast %3 : vector<256x128xf32> to vector<16x16x128xf32>
    %c0_4 = arith.constant 0 : index
    %c0_5 = arith.constant 0 : index
    %5 = vector.load %arg5[%c0_4, %c0_5] : memref<16x128xf32, #tpu.memory_space<vmem>>, vector<16x128xf32>
    %6 = vector.shape_cast %5 : vector<16x128xf32> to vector<1x16x128xf32>
    %7 = vector.broadcast %6 : vector<1x16x128xf32> to vector<16x16x128xf32>
    %8 = arith.addf %4, %7 : vector<16x16x128xf32>
    %cst_6 = arith.constant dense<0xFF800000> : vector<16x128xf32>
    %9 = vector.multi_reduction <maximumf>, %8, %cst_6 [1] : vector<16x16x128xf32> to vector<16x128xf32>
    %c0_7 = arith.constant 0 : index
    %c0_8 = arith.constant 0 : index
    %10 = vector.load %arg4[%c0_7, %c0_8] : memref<2x128xf32, #tpu.memory_space<vmem>>, vector<1x128xf32>
    %11 = vector.broadcast %10 : vector<1x128xf32> to vector<16x128xf32>
    %12 = arith.addf %9, %11 : vector<16x128xf32>
    %cst_9 = arith.constant 0.000000e+00 : f32
    %13 = vector.broadcast %cst_9 : f32 to vector<16x128xf32>
    %14 = arith.maximumf %12, %13 : vector<16x128xf32>
    %c0_10 = arith.constant 0 : index
    %c0_11 = arith.constant 0 : index
    %15 = vector.load %arg3[%c0_10, %c0_11] : memref<128x128xf32, #tpu.memory_space<vmem>>, vector<128x128xf32>
    %cst_12 = arith.constant dense<0.000000e+00> : vector<16x128xf32>
    %16 = tpu.matmul %14, %15, %cst_12 {dimension_numbers = #tpu.dot_dimension_numbers<[1], [0], [0], [1], [0, 0, 1, 1], [], []>} : vector<16x128xf32>, vector<128x128xf32>, vector<16x128xf32> -> vector<16x128xf32>
    %c1 = arith.constant 1 : index
    %c0_13 = arith.constant 0 : index
    %17 = vector.load %arg4[%c1, %c0_13] : memref<2x128xf32, #tpu.memory_space<vmem>>, vector<1x128xf32>
    %18 = vector.broadcast %17 : vector<1x128xf32> to vector<16x128xf32>
    %19 = arith.addf %16, %18 : vector<16x128xf32>
    %c0_14 = arith.constant 0 : index
    %c0_15 = arith.constant 0 : index
    %20 = vector.load %arg6[%c0_14, %c0_15] : memref<16x128xf32, #tpu.memory_space<vmem>>, vector<16x128xf32>
    tpu.vector_store %arg6[%c0_14, %c0_15], %19 {strides = array<i32>} : memref<16x128xf32, #tpu.memory_space<vmem>>, vector<16x128xf32>,
    return
  }
  func.func @transform_0(%arg0: i32) -> (i32, i32, i32) {
    %c0_i32 = arith.constant 0 : i32
    %c0_i32_0 = arith.constant 0 : i32
    %c0_i32_1 = arith.constant 0 : i32
    return %arg0, %c0_i32, %c0_i32_0 : i32, i32, i32
  }
  func.func @transform_1(%arg0: i32) -> (i32, i32) {
    %c0_i32 = arith.constant 0 : i32
    %c0_i32_0 = arith.constant 0 : i32
    %c0_i32_1 = arith.constant 0 : i32
    return %c0_i32, %c0_i32_0 : i32, i32
  }
  func.func @transform_2(%arg0: i32) -> (i32, i32) {
    %c0_i32 = arith.constant 0 : i32
    %c0_i32_0 = arith.constant 0 : i32
    %c0_i32_1 = arith.constant 0 : i32
    return %c0_i32, %c0_i32_0 : i32, i32
  }
  func.func @transform_3(%arg0: i32) -> (i32, i32) {
    %c0_i32 = arith.constant 0 : i32
    %c0_i32_0 = arith.constant 0 : i32
    %c0_i32_1 = arith.constant 0 : i32
    return %c0_i32, %c0_i32_0 : i32, i32
  }
  func.func @transform_4(%arg0: i32) -> (i32, i32) {
    %c0_i32 = arith.constant 0 : i32
    %c0_i32_0 = arith.constant 0 : i32
    %c0_i32_1 = arith.constant 0 : i32
    return %c0_i32, %c0_i32_0 : i32, i32
  }
  func.func @transform_5(%arg0: i32) -> (i32, i32) {
    %c0_i32 = arith.constant 0 : i32
    %c0_i32_0 = arith.constant 0 : i32
    return %arg0, %c0_i32 : i32, i32
  }
}

</mosaic_0001>

<llo_original>
// kernel: textcnn_forward.1
$region0: #{textcnn_forward.1}
  #allocation0 [shape = 'u32[]', space=smem, size = 0x4, offset = 0x4, fixed_abs, tag = 'smem constant byte address 0x4 - core index']
  #allocation1 [shape = 'u32[144,128]{1,0:T(1,128)}', space=vmem, size = 0x12000, scoped, tag = 'internal scratch']
  %s0 = inlined_call_operand.vmem [shape: bf16[16,16,128], index: 0, kind: input, shape index: {}]
  %s1 = inlined_call_operand.vmem [shape: bf16[128,128], index: 1, kind: input, shape index: {}]
  %s2 = inlined_call_operand.vmem [shape: f32[128,128], index: 2, kind: input, shape index: {}]
  %s3 = inlined_call_operand.vmem [shape: f32[2,128], index: 3, kind: input, shape index: {}]
  %s4 = inlined_call_operand.vmem [shape: f32[16,128], index: 4, kind: input, shape index: {}]
  %s5 = inlined_call_operand.vmem [shape: f32[16,128], index: 5, kind: output, shape index: {}]
  %s6 = sld [smem:[#allocation0]]
  $region30: #{textcnn_forward.1} parent=0
    _
  %s8 = ssub.s32 1, %s6
  %s9 = scalar_select 0, %s8, %s6
  // Predicated region
  $region2: #{textcnn_forward.1} parent=0 // pred_check
    _
  $region3: #{textcnn_forward.1} parent=0 // pred_check_branch
    %11 = sbr.rel (0) target = $region5
  $region4: #{textcnn_forward.1} parent=0 // pred_region
    _
  $region5: #{textcnn_forward.1} parent=0 // pred_fallthru
    _
  // Predicated region
  $region6: #{textcnn_forward.1} parent=0 // pred_check
    _
  $region7: #{textcnn_forward.1} parent=0 // pred_check_branch
    %13 = sbr.rel (0) target = $region9
  $region8: #{textcnn_forward.1} parent=0 // pred_region
    _
  $region9: #{textcnn_forward.1} parent=0 // pred_fallthru
    _
  // Predicated region
  $region10: #{textcnn_forward.1} parent=0 // pred_check
    _
  $region11: #{textcnn_forward.1} parent=0 // pred_check_branch
    %15 = sbr.rel (0) target = $region13
  $region12: #{textcnn_forward.1} parent=0 // pred_region
    _
  $region13: #{textcnn_forward.1} parent=0 // pred_fallthru
    _
  // Predicated region
  $region14: #{textcnn_forward.1} parent=0 // pred_check
    _
  $region15: #{textcnn_forward.1} parent=0 // pred_check_branch
    %17 = sbr.rel (0) target = $region17
  $region16: #{textcnn_forward.1} parent=0 // pred_region
    _
  $region17: #{textcnn_forward.1} parent=0 // pred_fallthru
    _
  // Predicated region
  $region18: #{textcnn_forward.1} parent=0 // pred_check
    _
  $region19: #{textcnn_forward.1} parent=0 // pred_check_branch
    %19 = sbr.rel (0) target = $region21
  $region20: #{textcnn_forward.1} parent=0 // pred_region
    _
  $region21: #{textcnn_forward.1} parent=0 // pred_fallthru
    _
  %v21 = vld [vmem:[%s0] sm:$0xf]
  %v22 = vld [vmem:[%s0 + $0x4] sm:$0xf]
  %v23 = vld [vmem:[%s0 + $0x8] sm:$0xf]
  %v24 = vld [vmem:[%s0 + $0xc] sm:$0xf]
  %v25 = vld [vmem:[%s0 + $0x10] sm:$0xf]
  %v26 = vld [vmem:[%s0 + $0x14] sm:$0xf]
  %v27 = vld [vmem:[%s0 + $0x18] sm:$0xf]
  %v28 = vld [vmem:[%s0 + $0x1c] sm:$0xf]
  %v29 = vld [vmem:[%s0 + $0x20] sm:$0xf]
  %v30 = vld [vmem:[%s0 + $0x24] sm:$0xf]
  %v31 = vld [vmem:[%s0 + $0x28] sm:$0xf]
  %v32 = vld [vmem:[%s0 + $0x2c] sm:$0xf]
  %v33 = vld [vmem:[%s0 + $0x30] sm:$0xf]
  %v34 = vld [vmem:[%s0 + $0x34] sm:$0xf]
  %v35 = vld [vmem:[%s0 + $0x38] sm:$0xf]
  %v36 = vld [vmem:[%s0 + $0x3c] sm:$0xf]
  %v37 = vld [vmem:[%s0 + $0x40] sm:$0xf]
  %v38 = vld [vmem:[%s0 + $0x44] sm:$0xf]
  %v39 = vld [vmem:[%s0 + $0x48] sm:$0xf]
  %v40 = vld [vmem:[%s0 + $0x4c] sm:$0xf]
  %v41 = vld [vmem:[%s0 + $0x50] sm:$0xf]
  %v42 = vld [vmem:[%s0 + $0x54] sm:$0xf]
  %v43 = vld [vmem:[%s0 + $0x58] sm:$0xf]
  %v44 = vld [vmem:[%s0 + $0x5c] sm:$0xf]
  %v45 = vld [vmem:[%s0 + $0x60] sm:$0xf]
  %v46 = vld [vmem:[%s0 + $0x64] sm:$0xf]
  %v47 = vld [vmem:[%s0 + $0x68] sm:$0xf]
  %v48 = vld [vmem:[%s0 + $0x6c] sm:$0xf]
  %v49 = vld [vmem:[%s0 + $0x70] sm:$0xf]
  %v50 = vld [vmem:[%s0 + $0x74] sm:$0xf]
  %v51 = vld [vmem:[%s0 + $0x78] sm:$0xf]
  %v52 = vld [vmem:[%s0 + $0x7c] sm:$0xf]
  %v53 = vld [vmem:[%s1] sm:$0xf]
  %v54 = vld [vmem:[%s1 + $0x4] sm:$0xf]
  %v55 = vld [vmem:[%s1 + $0x8] sm:$0xf]
  %v56 = vld [vmem:[%s1 + $0xc] sm:$0xf]
  %v57 = vld [vmem:[%s1 + $0x10] sm:$0xf]
  %v58 = vld [vmem:[%s1 + $0x14] sm:$0xf]
  %v59 = vld [vmem:[%s1 + $0x18] sm:$0xf]
  %v60 = vld [vmem:[%s1 + $0x1c] sm:$0xf]
  %v61 = vld [vmem:[%s1 + $0x20] sm:$0xf]
  %v62 = vld [vmem:[%s1 + $0x24] sm:$0xf]
  %v63 = vld [vmem:[%s1 + $0x28] sm:$0xf]
  %v64 = vld [vmem:[%s1 + $0x2c] sm:$0xf]
  %v65 = vld [vmem:[%s1 + $0x30] sm:$0xf]
  %v66 = vld [vmem:[%s1 + $0x34] sm:$0xf]
  %v67 = vld [vmem:[%s1 + $0x38] sm:$0xf]
  %v68 = vld [vmem:[%s1 + $0x3c] sm:$0xf]
  %v101 = vunpack.c.l.b16 %v21
  %v102 = vunpack.c.l.b16 %v22
  %v103 = vunpack.c.l.b16 %v23
  %v104 = vunpack.c.l.b16 %v24
  %v105 = vunpack.c.l.b16 %v25
  %v106 = vunpack.c.l.b16 %v26
  %v107 = vunpack.c.l.b16 %v27
  %v108 = vunpack.c.l.b16 %v28
  %v109 = vunpack.c.l.b16 %v29
  %v110 = vunpack.c.l.b16 %v30
  %v111 = vunpack.c.l.b16 %v31
  %v112 = vunpack.c.l.b16 %v32
  %v113 = vunpack.c.l.b16 %v33
  %v114 = vunpack.c.l.b16 %v34
  %v115 = vunpack.c.l.b16 %v35
  %v116 = vunpack.c.l.b16 %v36
  %v117 = vunpack.c.l.b16 %v37
  %v118 = vunpack.c.l.b16 %v38
  %v119 = vunpack.c.l.b16 %v39
  %v120 = vunpack.c.l.b16 %v40
  %v121 = vunpack.c.l.b16 %v41
  %v122 = vunpack.c.l.b16 %v42
  %v123 = vunpack.c.l.b16 %v43
  %v124 = vunpack.c.l.b16 %v44
  %v125 = vunpack.c.l.b16 %v45
  %v126 = vunpack.c.l.b16 %v46
  %v127 = vunpack.c.l.b16 %v47
  %v128 = vunpack.c.l.b16 %v48
  %v129 = vunpack.c.l.b16 %v49
  %v130 = vunpack.c.l.b16 %v50
  %v131 = vunpack.c.l.b16 %v51
  %v132 = vunpack.c.l.b16 %v52
  %v133 = vpack.c.b16 %v102, %v101
  %v134 = vpack.c.b16 %v104, %v103
  %v135 = vpack.c.b16 %v106, %v105
  %v136 = vpack.c.b16 %v108, %v107
  %v137 = vpack.c.b16 %v110, %v109
  %v138 = vpack.c.b16 %v112, %v111
  %v139 = vpack.c.b16 %v114, %v113
  %v140 = vpack.c.b16 %v116, %v115
  %v141 = vpack.c.b16 %v118, %v117
  %v142 = vpack.c.b16 %v120, %v119
  %v143 = vpack.c.b16 %v122, %v121
  %v144 = vpack.c.b16 %v124, %v123
  %v145 = vpack.c.b16 %v126, %v125
  %v146 = vpack.c.b16 %v128, %v127
  %v147 = vpack.c.b16 %v130, %v129
  %v148 = vpack.c.b16 %v132, %v131
  %v181 = vunpack.c.l.b16 %v53
  %v182 = vunpack.c.l.b16 %v54
  %v183 = vunpack.c.l.b16 %v55
  %v184 = vunpack.c.l.b16 %v56
  %v185 = vunpack.c.l.b16 %v57
  %v186 = vunpack.c.l.b16 %v58
  %v187 = vunpack.c.l.b16 %v59
  %v188 = vunpack.c.l.b16 %v60
  %v189 = vunpack.c.l.b16 %v61
  %v190 = vunpack.c.l.b16 %v62
  %v191 = vunpack.c.l.b16 %v63
  %v192 = vunpack.c.l.b16 %v64
  %v193 = vunpack.c.l.b16 %v65
  %v194 = vunpack.c.l.b16 %v66
  %v195 = vunpack.c.l.b16 %v67
  %v196 = vunpack.c.l.b16 %v68
  %v197 = vpack.c.b16 %v182, %v181
  %v198 = vpack.c.b16 %v184, %v183
  %v199 = vpack.c.b16 %v186, %v185
  %v200 = vpack.c.b16 %v188, %v187
  %v201 = vpack.c.b16 %v190, %v189
  %v202 = vpack.c.b16 %v192, %v191
  %v203 = vpack.c.b16 %v194, %v193
  %v204 = vpack.c.b16 %v196, %v195
  %213 = vmatprep.subr.bf16.mxu0 0
  %214 = vmatpush1.bf16.msra.mxu0 %v197
  %215 = vmatprep.subr.bf16.mxu0 0
  %216 = vmatpush1.bf16.msra.mxu0 %v198
  %217 = vmatprep.subr.bf16.mxu0 0
  %218 = vmatpush1.bf16.msra.mxu0 %v199
  %219 = vmatprep.subr.bf16.mxu0 0
  %220 = vmatpush1.bf16.msra.mxu0 %v200
  %221 = vmatprep.subr.bf16.mxu0 0
  %222 = vmatpush1.bf16.msra.mxu0 %v201
  %223 = vmatprep.subr.bf16.mxu0 0
  %224 = vmatpush1.bf16.msra.mxu0 %v202
  %225 = vmatprep.subr.bf16.mxu0 0
  %226 = vmatpush1.bf16.msra.mxu0 %v203
  %227 = vmatprep.subr.bf16.mxu0 0
  %228 = vmatpush1.bf16.msra.mxu0 %v204
  %229 = vmatprep.subr.bf16.mxu0 0
  %230 = vmatpush1.bf16.msra.mxu0 0
  %231 = vmatprep.subr.bf16.mxu0 0
  %232 = vmatpush1.bf16.msra.mxu0 0
  %233 = vmatprep.subr.bf16.mxu0 0
  %234 = vmatpush1.bf16.msra.mxu0 0
  %235 = vmatprep.subr.bf16.mxu0 0
  %236 = vmatpush1.bf16.msra.mxu0 0
  %237 = vmatprep.subr.bf16.mxu0 0
  %238 = vmatpush1.bf16.msra.mxu0 0
  %239 = vmatprep.subr.bf16.mxu0 0
  %240 = vmatpush1.bf16.msra.mxu0 0
  %241 = vmatprep.subr.bf16.mxu0 0
  %242 = vmatpush1.bf16.msra.mxu0 0
  %243 = vmatprep.subr.bf16.mxu0 0
  %244 = vmatpush1.bf16.msra.mxu0 0
  %245 = vmatprep.mubr.bf16.mxu0 0
  %246 = vmatmul.mubr.bf16.gmra.mrb[0].mxu0 %v133
  %v247 = vpop.f32.mrb[0].mxu0
  %v248 = vadd.f32 0.0, %v247
  %v249 = vpop.f32.mrb[0].mxu0
  %v250 = vpop.f32.mrb[0].mxu0
  %v251 = vadd.f32 0.0, %v250
  %v252 = vpop.f32.mrb[0].mxu0
  %253 = vmatprep.mubr.bf16.mxu0 0
  %254 = vmatmul.mubr.bf16.gmra.mrb[0].mxu0 %v134
  %v255 = vpop.f32.mrb[0].mxu0
  %v256 = vadd.f32 0.0, %v255
  %v257 = vpop.f32.mrb[0].mxu0
  %v258 = vpop.f32.mrb[0].mxu0
  %v259 = vadd.f32 0.0, %v258
  %v260 = vpop.f32.mrb[0].mxu0
  %261 = vmatprep.mubr.bf16.mxu0 0
  %262 = vmatmul.mubr.bf16.gmra.mrb[0].mxu0 %v135
  %v263 = vpop.f32.mrb[0].mxu0
  %v264 = vadd.f32 0.0, %v263
  %v265 = vpop.f32.mrb[0].mxu0
  %v266 = vpop.f32.mrb[0].mxu0
  %v267 = vadd.f32 0.0, %v266
  %v268 = vpop.f32.mrb[0].mxu0
  %269 = vmatprep.mubr.bf16.mxu0 0
  %270 = vmatmul.mubr.bf16.gmra.mrb[0].mxu0 %v136
  %v271 = vpop.f32.mrb[0].mxu0
  %v272 = vadd.f32 0.0, %v271
  %v273 = vpop.f32.mrb[0].mxu0
  %v274 = vpop.f32.mrb[0].mxu0
  %v275 = vadd.f32 0.0, %v274
  %v276 = vpop.f32.mrb[0].mxu0
  %277 = vmatprep.mubr.bf16.mxu0 0
  %278 = vmatmul.mubr.bf16.gmra.mrb[0].mxu0 %v137
  %v279 = vpop.f32.mrb[0].mxu0
  %v280 = vadd.f32 0.0, %v279
  %v281 = vpop.f32.mrb[0].mxu0
  %v282 = vpop.f32.mrb[0].mxu0
  %v283 = vadd.f32 0.0, %v282
  %v284 = vpop.f32.mrb[0].mxu0
  %285 = vmatprep.mubr.bf16.mxu0 0
  %286 = vmatmul.mubr.bf16.gmra.mrb[0].mxu0 %v138
  %v287 = vpop.f32.mrb[0].mxu0
  %v288 = vadd.f32 0.0, %v287
  %v289 = vpop.f32.mrb[0].mxu0
  %v290 = vpop.f32.mrb[0].mxu0
  %v291 = vadd.f32 0.0, %v290
  %v292 = vpop.f32.mrb[0].mxu0
  %293 = vmatprep.mubr.bf16.mxu0 0
  %294 = vmatmul.mubr.bf16.gmra.mrb[0].mxu0 %v139
  %v295 = vpop.f32.mrb[0].mxu0
  %v296 = vadd.f32 0.0, %v295
  %v297 = vpop.f32.mrb[0].mxu0
  %v298 = vpop.f32.mrb[0].mxu0
  %v299 = vadd.f32 0.0, %v298
  %v300 = vpop.f32.mrb[0].mxu0
  %301 = vmatprep.mubr.bf16.mxu0 0
  %302 = vmatmul.mubr.bf16.gmra.mrb[0].mxu0 %v140
  %v303 = vpop.f32.mrb[0].mxu0
  %v304 = vadd.f32 0.0, %v303
  %v305 = vpop.f32.mrb[0].mxu0
  %v306 = vpop.f32.mrb[0].mxu0
  %v307 = vadd.f32 0.0, %v306
  %v308 = vpop.f32.mrb[0].mxu0
  %309 = vmatprep.mubr.bf16.mxu0 0
  %310 = vmatmul.mubr.bf16.gmra.mrb[0].mxu0 %v141
  %v311 = vpop.f32.mrb[0].mxu0
  %v312 = vadd.f32 0.0, %v311
  %v313 = vpop.f32.mrb[0].mxu0
  %v314 = vpop.f32.mrb[0].mxu0
  %v315 = vadd.f32 0.0, %v314
  %v316 = vpop.f32.mrb[0].mxu0
  %317 = vmatprep.mubr.bf16.mxu0 0
  %318 = vmatmul.mubr.bf16.gmra.mrb[0].mxu0 %v142
  %v319 = vpop.f32.mrb[0].mxu0
  %v320 = vadd.f32 0.0, %v319
  %v321 = vpop.f32.mrb[0].mxu0
  %v322 = vpop.f32.mrb[0].mxu0
  %v323 = vadd.f32 0.0, %v322
  %v324 = vpop.f32.mrb[0].mxu0
  %325 = vmatprep.mubr.bf16.mxu0 0
  %326 = vmatmul.mubr.bf16.gmra.mrb[0].mxu0 %v143
  %v327 = vpop.f32.mrb[0].mxu0
  %v328 = vadd.f32 0.0, %v327
  %v329 = vpop.f32.mrb[0].mxu0
  %v330 = vpop.f32.mrb[0].mxu0
  %v331 = vadd.f32 0.0, %v330
  %v332 = vpop.f32.mrb[0].mxu0
  %333 = vmatprep.mubr.bf16.mxu0 0
  %334 = vmatmul.mubr.bf16.gmra.mrb[0].mxu0 %v144
  %v335 = vpop.f32.mrb[0].mxu0
  %v336 = vadd.f32 0.0, %v335
  %v337 = vpop.f32.mrb[0].mxu0
  %v338 = vpop.f32.mrb[0].mxu0
  %v339 = vadd.f32 0.0, %v338
  %v340 = vpop.f32.mrb[0].mxu0
  %341 = vmatprep.mubr.bf16.mxu0 0
  %342 = vmatmul.mubr.bf16.gmra.mrb[0].mxu0 %v145
  %v343 = vpop.f32.mrb[0].mxu0
  %v344 = vadd.f32 0.0, %v343
  %v345 = vpop.f32.mrb[0].mxu0
  %v346 = vpop.f32.mrb[0].mxu0
  %v347 = vadd.f32 0.0, %v346
  %v348 = vpop.f32.mrb[0].mxu0
  %349 = vmatprep.mubr.bf16.mxu0 0
  %350 = vmatmul.mubr.bf16.gmra.mrb[0].mxu0 %v146
  %v351 = vpop.f32.mrb[0].mxu0
  %v352 = vadd.f32 0.0, %v351
  %v353 = vpop.f32.mrb[0].mxu0
  %v354 = vpop.f32.mrb[0].mxu0
  %v355 = vadd.f32 0.0, %v354
  %v356 = vpop.f32.mrb[0].mxu0
  %357 = vmatprep.mubr.bf16.mxu0 0
  %358 = vmatmul.mubr.bf16.gmra.mrb[0].mxu0 %v147
  %v359 = vpop.f32.mrb[0].mxu0
  %v360 = vadd.f32 0.0, %v359
  %v361 = vpop.f32.mrb[0].mxu0
  %v362 = vpop.f32.mrb[0].mxu0
  %v363 = vadd.f32 0.0, %v362
  %v364 = vpop.f32.mrb[0].mxu0
  %365 = vmatprep.mubr.bf16.mxu0 0
  %366 = vmatmul.mubr.bf16.gmra.mrb[0].mxu0 %v148
  %v367 = vpop.f32.mrb[0].mxu0
  %v368 = vadd.f32 0.0, %v367
  %v369 = vpop.f32.mrb[0].mxu0
  %v370 = vpop.f32.mrb[0].mxu0
  %v371 = vadd.f32 0.0, %v370
  %v372 = vpop.f32.mrb[0].mxu0
  %373 = vdwg.mxu0
  %v374 = vld [vmem:[%s4] sm:$0xff]
  %v375 = vld [vmem:[%s4 + $0x8] sm:$0xff]
  %v376 = vadd.f32 %v248, %v374
  %v377 = vadd.f32 %v251, %v375
  %v378 = vadd.f32 %v256, %v374
  %v379 = vadd.f32 %v259, %v375
  %v380 = vadd.f32 %v264, %v374
  %v381 = vadd.f32 %v267, %v375
  %v382 = vadd.f32 %v272, %v374
  %v383 = vadd.f32 %v275, %v375
  %v384 = vadd.f32 %v280, %v374
  %v385 = vadd.f32 %v283, %v375
  %v386 = vadd.f32 %v288, %v374
  %v387 = vadd.f32 %v291, %v375
  %v388 = vadd.f32 %v296, %v374
  %v389 = vadd.f32 %v299, %v375
  %v390 = vadd.f32 %v304, %v374
  %v391 = vadd.f32 %v307, %v375
  %v392 = vadd.f32 %v312, %v374
  %v393 = vadd.f32 %v315, %v375
  %v394 = vadd.f32 %v320, %v374
  %v395 = vadd.f32 %v323, %v375
  %v396 = vadd.f32 %v328, %v374
  %v397 = vadd.f32 %v331, %v375
  %v398 = vadd.f32 %v336, %v374
  %v399 = vadd.f32 %v339, %v375
  %v400 = vadd.f32 %v344, %v374
  %v401 = vadd.f32 %v347, %v375
  %v402 = vadd.f32 %v352, %v374
  %v403 = vadd.f32 %v355, %v375
  %v404 = vadd.f32 %v360, %v374
  %v405 = vadd.f32 %v363, %v375
  %v406 = vadd.f32 %v368, %v374
  %v407 = vadd.f32 %v371, %v375
  %v408 = vmax.f32 %v376, %v377
  %v409 = vrot.slane %v408, 4
  %v410 = vmax.f32 %v408, %v409
  %v411 = vrot.slane %v410, 2
  %v412 = vmax.f32 %v410, %v411
  %v413 = vrot.slane %v412, 1
  %v414 = vmax.f32 %v412, %v413
  %v415 = vmax.f32 %v378, %v379
  %v416 = vrot.slane %v415, 4
  %v417 = vmax.f32 %v415, %v416
  %v418 = vrot.slane %v417, 2
  %v419 = vmax.f32 %v417, %v418
  %v420 = vrot.slane %v419, 1
  %v421 = vmax.f32 %v419, %v420
  %v422 = vmax.f32 %v380, %v381
  %v423 = vrot.slane %v422, 4
  %v424 = vmax.f32 %v422, %v423
  %v425 = vrot.slane %v424, 2
  %v426 = vmax.f32 %v424, %v425
  %v427 = vrot.slane %v426, 1
  %v428 = vmax.f32 %v426, %v427
  %v429 = vmax.f32 %v382, %v383
  %v430 = vrot.slane %v429, 4
  %v431 = vmax.f32 %v429, %v430
  %v432 = vrot.slane %v431, 2
  %v433 = vmax.f32 %v431, %v432
  %v434 = vrot.slane %v433, 1
  %v435 = vmax.f32 %v433, %v434
  %v436 = vmax.f32 %v384, %v385
  %v437 = vrot.slane %v436, 4
  %v438 = vmax.f32 %v436, %v437
  %v439 = vrot.slane %v438, 2
  %v440 = vmax.f32 %v438, %v439
  %v441 = vrot.slane %v440, 1
  %v442 = vmax.f32 %v440, %v441
  %v443 = vmax.f32 %v386, %v387
  %v444 = vrot.slane %v443, 4
  %v445 = vmax.f32 %v443, %v444
  %v446 = vrot.slane %v445, 2
  %v447 = vmax.f32 %v445, %v446
  %v448 = vrot.slane %v447, 1
  %v449 = vmax.f32 %v447, %v448
  %v450 = vmax.f32 %v388, %v389
  %v451 = vrot.slane %v450, 4
  %v452 = vmax.f32 %v450, %v451
  %v453 = vrot.slane %v452, 2
  %v454 = vmax.f32 %v452, %v453
  %v455 = vrot.slane %v454, 1
  %v456 = vmax.f32 %v454, %v455
  %v457 = vmax.f32 %v390, %v391
  %v458 = vrot.slane %v457, 4
  %v459 = vmax.f32 %v457, %v458
  %v460 = vrot.slane %v459, 2
  %v461 = vmax.f32 %v459, %v460
  %v462 = vrot.slane %v461, 1
  %v463 = vmax.f32 %v461, %v462
  %v464 = vmax.f32 %v392, %v393
  %v465 = vrot.slane %v464, 4
  %v466 = vmax.f32 %v464, %v465
  %v467 = vrot.slane %v466, 2
  %v468 = vmax.f32 %v466, %v467
  %v469 = vrot.slane %v468, 1
  %v470 = vmax.f32 %v468, %v469
  %v471 = vmax.f32 %v394, %v395
  %v472 = vrot.slane %v471, 4
  %v473 = vmax.f32 %v471, %v472
  %v474 = vrot.slane %v473, 2
  %v475 = vmax.f32 %v473, %v474
  %v476 = vrot.slane %v475, 1
  %v477 = vmax.f32 %v475, %v476
  %v478 = vmax.f32 %v396, %v397
  %v479 = vrot.slane %v478, 4
  %v480 = vmax.f32 %v478, %v479
  %v481 = vrot.slane %v480, 2
  %v482 = vmax.f32 %v480, %v481
  %v483 = vrot.slane %v482, 1
  %v484 = vmax.f32 %v482, %v483
  %v485 = vmax.f32 %v398, %v399
  %v486 = vrot.slane %v485, 4
  %v487 = vmax.f32 %v485, %v486
  %v488 = vrot.slane %v487, 2
  %v489 = vmax.f32 %v487, %v488
  %v490 = vrot.slane %v489, 1
  %v491 = vmax.f32 %v489, %v490
  %v492 = vmax.f32 %v400, %v401
  %v493 = vrot.slane %v492, 4
  %v494 = vmax.f32 %v492, %v493
  %v495 = vrot.slane %v494, 2
  %v496 = vmax.f32 %v494, %v495
  %v497 = vrot.slane %v496, 1
  %v498 = vmax.f32 %v496, %v497
  %v499 = vmax.f32 %v402, %v403
  %v500 = vrot.slane %v499, 4
  %v501 = vmax.f32 %v499, %v500
  %v502 = vrot.slane %v501, 2
  %v503 = vmax.f32 %v501, %v502
  %v504 = vrot.slane %v503, 1
  %v505 = vmax.f32 %v503, %v504
  %v506 = vmax.f32 %v404, %v405
  %v507 = vrot.slane %v506, 4
  %v508 = vmax.f32 %v506, %v507
  %v509 = vrot.slane %v508, 2
  %v510 = vmax.f32 %v508, %v509
  %v511 = vrot.slane %v510, 1
  %v512 = vmax.f32 %v510, %v511
  %v513 = vmax.f32 %v406, %v407
  %v514 = vrot.slane %v513, 4
  %v515 = vmax.f32 %v513, %v514
  %v516 = vrot.slane %v515, 2
  %v517 = vmax.f32 %v515, %v516
  %v518 = vrot.slane %v517, 1
  %v519 = vmax.f32 %v517, %v518
  %v520 = vld [vmem:[%s3] sm:$0x1]
  %v521 = vlaneseq
  %v522 = vshrl.u32 %v521, 7
  %v523 = vsub.s32 0, %v522
  %v524 = vrot.slane %v520, %v523
  %v525 = vadd.f32 %v414, %v524
  %v526 = vadd.f32 %v421, %v524
  %v527 = vadd.f32 %v428, %v524
  %v528 = vadd.f32 %v435, %v524
  %v529 = vadd.f32 %v442, %v524
  %v530 = vadd.f32 %v449, %v524
  %v531 = vadd.f32 %v456, %v524
  %v532 = vadd.f32 %v463, %v524
  %v533 = vadd.f32 %v470, %v524
  %v534 = vadd.f32 %v477, %v524
  %v535 = vadd.f32 %v484, %v524
  %v536 = vadd.f32 %v491, %v524
  %v537 = vadd.f32 %v498, %v524
  %v538 = vadd.f32 %v505, %v524
  %v539 = vadd.f32 %v512, %v524
  %v540 = vadd.f32 %v519, %v524
  %v541 = vmax.f32 %v525, 0.0
  %v542 = vmax.f32 %v526, 0.0
  %v543 = vmax.f32 %v527, 0.0
  %v544 = vmax.f32 %v528, 0.0
  %v545 = vmax.f32 %v529, 0.0
  %v546 = vmax.f32 %v530, 0.0
  %v547 = vmax.f32 %v531, 0.0
  %v548 = vmax.f32 %v532, 0.0
  %v549 = vmax.f32 %v533, 0.0
  %v550 = vmax.f32 %v534, 0.0
  %v551 = vmax.f32 %v535, 0.0
  %v552 = vmax.f32 %v536, 0.0
  %v553 = vmax.f32 %v537, 0.0
  %v554 = vmax.f32 %v538, 0.0
  %v555 = vmax.f32 %v539, 0.0
  %v556 = vmax.f32 %v540, 0.0
  %v557 = vld [vmem:[%s2] sm:$0xff]
  %v558 = vld [vmem:[%s2 + $0x8] sm:$0xff]
  %v559 = vld [vmem:[%s2 + $0x10] sm:$0xff]
  %v560 = vld [vmem:[%s2 + $0x18] sm:$0xff]
  %v561 = vld [vmem:[%s2 + $0x20] sm:$0xff]
  %v562 = vld [vmem:[%s2 + $0x28] sm:$0xff]
  %v563 = vld [vmem:[%s2 + $0x30] sm:$0xff]
  %v564 = vld [vmem:[%s2 + $0x38] sm:$0xff]
  %v565 = vld [vmem:[%s2 + $0x40] sm:$0xff]
  %v566 = vld [vmem:[%s2 + $0x48] sm:$0xff]
  %v567 = vld [vmem:[%s2 + $0x50] sm:$0xff]
  %v568 = vld [vmem:[%s2 + $0x58] sm:$0xff]
  %v569 = vld [vmem:[%s2 + $0x60] sm:$0xff]
  %v570 = vld [vmem:[%s2 + $0x68] sm:$0xff]
  %v571 = vld [vmem:[%s2 + $0x70] sm:$0xff]
  %v572 = vld [vmem:[%s2 + $0x78] sm:$0xff]
  %v573 = vld [vmem:[%s3 + $0x1] sm:$0x1]
  %v574 = vlaneseq
  %v575 = vshrl.u32 %v574, 7
  %v576 = vsub.s32 0, %v575
  %v577 = vrot.slane %v573, %v576
  %v594 = vrot.slane %v542, 7
  %vm595 = vcmask 1041409
  %v596 = vsel %vm595, %v594, %v541
  %v597 = vrot.slane %v543, 6
  %vm598 = vcmask 1042434
  %v599 = vsel %vm598, %v597, %v596
  %v600 = vrot.slane %v544, 5
  %vm601 = vcmask 1043459
  %v602 = vsel %vm601, %v600, %v599
  %v603 = vrot.slane %v545, 4
  %vm604 = vcmask 1044484
  %v605 = vsel %vm604, %v603, %v602
  %v606 = vrot.slane %v546, 3
  %vm607 = vcmask 1045509
  %v608 = vsel %vm607, %v606, %v605
  %v609 = vrot.slane %v547, 2
  %vm610 = vcmask 1046534
  %v611 = vsel %vm610, %v609, %v608
  %v612 = vrot.slane %v548, 1
  %vm613 = vcmask 1047559
  %v614 = vsel %vm613, %v612, %v611
  %v615 = vrot.slane %v550, 7
  %v616 = vsel %vm595, %v615, %v549
  %v617 = vrot.slane %v551, 6
  %v618 = vsel %vm598, %v617, %v616
  %v619 = vrot.slane %v552, 5
  %v620 = vsel %vm601, %v619, %v618
  %v621 = vrot.slane %v553, 4
  %v622 = vsel %vm604, %v621, %v620
  %v623 = vrot.slane %v554, 3
  %v624 = vsel %vm607, %v623, %v622
  %v625 = vrot.slane %v555, 2
  %v626 = vsel %vm610, %v625, %v624
  %v627 = vrot.slane %v556, 1
  %v628 = vsel %vm613, %v627, %v626
  %631 = vmatprep.subr.mxu0 0.0
  %632 = vmatpush1.msra.mxu0 %v557
  %633 = vmatprep.subr.mxu0 0.0
  %634 = vmatpush1.msra.mxu0 %v558
  %635 = vmatprep.subr.mxu0 0.0
  %636 = vmatpush1.msra.mxu0 %v559
  %637 = vmatprep.subr.mxu0 0.0
  %638 = vmatpush1.msra.mxu0 %v560
  %639 = vmatprep.subr.mxu0 0.0
  %640 = vmatpush1.msra.mxu0 %v561
  %641 = vmatprep.subr.mxu0 0.0
  %642 = vmatpush1.msra.mxu0 %v562
  %643 = vmatprep.subr.mxu0 0.0
  %644 = vmatpush1.msra.mxu0 %v563
  %645 = vmatprep.subr.mxu0 0.0
  %646 = vmatpush1.msra.mxu0 %v564
  %647 = vmatprep.subr.mxu0 0.0
  %648 = vmatpush1.msra.mxu0 %v565
  %649 = vmatprep.subr.mxu0 0.0
  %650 = vmatpush1.msra.mxu0 %v566
  %651 = vmatprep.subr.mxu0 0.0
  %652 = vmatpush1.msra.mxu0 %v567
  %653 = vmatprep.subr.mxu0 0.0
  %654 = vmatpush1.msra.mxu0 %v568
  %655 = vmatprep.subr.mxu0 0.0
  %656 = vmatpush1.msra.mxu0 %v569
  %657 = vmatprep.subr.mxu0 0.0
  %658 = vmatpush1.msra.mxu0 %v570
  %659 = vmatprep.subr.mxu0 0.0
  %660 = vmatpush1.msra.mxu0 %v571
  %661 = vmatprep.subr.mxu0 0.0
  %662 = vmatpush1.msra.mxu0 %v572
  %663 = vmatprep.subr.mxu0 0.0
  %664 = vmatpush1.msra.mxu0 0.0
  %665 = vmatprep.subr.mxu0 0.0
  %666 = vmatpush1.msra.mxu0 0.0
  %667 = vmatprep.subr.mxu0 0.0
  %668 = vmatpush1.msra.mxu0 0.0
  %669 = vmatprep.subr.mxu0 0.0
  %670 = vmatpush1.msra.mxu0 0.0
  %671 = vmatprep.subr.mxu0 0.0
  %672 = vmatpush1.msra.mxu0 0.0
  %673 = vmatprep.subr.mxu0 0.0
  %674 = vmatpush1.msra.mxu0 0.0
  %675 = vmatprep.subr.mxu0 0.0
  %676 = vmatpush1.msra.mxu0 0.0
  %677 = vmatprep.subr.mxu0 0.0
  %678 = vmatpush1.msra.mxu0 0.0
  %679 = vmatprep.subr.mxu0 0.0
  %680 = vmatpush1.msra.mxu0 0.0
  %681 = vmatprep.subr.mxu0 0.0
  %682 = vmatpush1.msra.mxu0 0.0
  %683 = vmatprep.subr.mxu0 0.0
  %684 = vmatpush1.msra.mxu0 0.0
  %685 = vmatprep.subr.mxu0 0.0
  %686 = vmatpush1.msra.mxu0 0.0
  %687 = vmatprep.subr.mxu0 0.0
  %688 = vmatpush1.msra.mxu0 0.0
  %689 = vmatprep.subr.mxu0 0.0
  %690 = vmatpush1.msra.mxu0 0.0
  %691 = vmatprep.subr.mxu0 0.0
  %692 = vmatpush1.msra.mxu0 0.0
  %693 = vmatprep.subr.mxu0 0.0
  %694 = vmatpush1.msra.mxu0 0.0
  %695 = vmatprep.mubr.f32.mxu0 0.0
  %696 = vmatmul.mubr.f32.gmra.mrb[0].mxu0 %v614
  %v697 = vpop.f32.mrb[0].mxu0
  %v698 = vadd.f32 %v577, %v697
  %v699 = vpop.f32.mrb[0].mxu0
  %700 = vmatprep.mubr.f32.mxu0 0.0
  %701 = vmatmul.mubr.f32.gmra.mrb[0].mxu0 %v628
  %v702 = vpop.f32.mrb[0].mxu0
  %v703 = vadd.f32 %v577, %v702
  %v704 = vpop.f32.mrb[0].mxu0
  %705 = vdwg.mxu0
  %706 = vst [vmem:[%s5] sm:$0xff] %v698
  %707 = vst [vmem:[%s5 + $0x8] sm:$0xff] %v703
  // Predicated region
  $region22: #{textcnn_forward.1} parent=0 // pred_check
    _
  $region23: #{textcnn_forward.1} parent=0 // pred_check_branch
    %709 = sbr.rel (0) target = $region25
  $region24: #{textcnn_forward.1} parent=0 // pred_region
    _
  $region25: #{textcnn_forward.1} parent=0 // pred_fallthru
    _
  // Predicated region
  $region26: #{textcnn_forward.1} parent=0 // pred_check
    _
  $region27: #{textcnn_forward.1} parent=0 // pred_check_branch
    %711 = sbr.rel (0) target = $region29
  $region28: #{textcnn_forward.1} parent=0 // pred_region
    _
  $region29: #{textcnn_forward.1} parent=0 // pred_fallthru
    _

</llo_original>
